<compile_context>
chip_gen: v6e
topology: v6e:2x2x1
jax: 0.10.0
libtpu: 0.0.40
codegen_flags: <defaults>
</compile_context>

<pallas_src>
import jax
import jax.numpy as jnp
from jax.experimental import pallas as pl
from jax.experimental.pallas import tpu as pltpu


_LANE = 128
_MIB = 1024 * 1024
_MIN_GRID_STEPS = 8  # keep both v7x TensorCores fed via the "parallel" axis


def _ts1_kernel(thr_ref, x_ref, o_ref):
    """out = heaviside(x - threshold), written in o_ref.dtype."""
    x = x_ref[...]
    if jnp.issubdtype(x.dtype, jnp.floating):
        spike = (x - thr_ref[0].astype(x.dtype)) >= 0
    else:
        # Compare in f32 so a fractional threshold is not truncated for
        # non-float inputs (matches PyTorch's float-promoted subtraction).
        spike = (x.astype(jnp.float32) - thr_ref[0]) >= 0
    o_ref[...] = spike.astype(o_ref.dtype)


def _vmem_capacity_bytes():
    try:
        return int(pltpu.get_tpu_info().vmem_capacity_bytes)
    except Exception:
        return 64 * _MIB  # conservative: v7x has the smallest per-core VMEM


def _choose_cols(total):
    """Widest lane-dense column count that exactly divides `total`."""
    for cols in (8192, 4096, 2048, 1024, 512, 256, 128):
        if total % cols == 0:
            return cols, 0
    cols = 512  # ragged element count: pad up (rare; see TODO below)
    return cols, (-total) % cols


def _choose_tile_rows(rows, cols, itemsize, target_tile_bytes, sub_mult):
    """Largest row-tile <= target bytes, while keeping >= 8 grid steps."""
    if rows <= sub_mult:
        return rows  # one block; block dim == full array dim is always legal
    row_bytes = cols * itemsize
    tr = max(sub_mult, (target_tile_bytes // row_bytes) // sub_mult * sub_mult)
    if tr >= rows:
        tr = rows
    if rows >= _MIN_GRID_STEPS * sub_mult:
        # Bound tr so the grid has at least ~_MIN_GRID_STEPS steps (megacore).
        max_tr = max(sub_mult,
                     (pl.cdiv(rows, _MIN_GRID_STEPS) // sub_mult) * sub_mult)
        tr = min(tr, max_tr)
    return tr


def ts1_node_forward(x, threshold=1.0, *, out_dtype=None, target_tile_bytes=None):
    """Pallas TPU implementation of TS1Node.forward: heaviside(x - threshold)."""
    orig_shape = x.shape
    in_dtype = jnp.dtype(x.dtype)
    out_dt = in_dtype if out_dtype is None else jnp.dtype(out_dtype)
    total = x.size
    if total == 0:
        return jnp.zeros(orig_shape, out_dt)

    in_bytes, out_bytes = in_dtype.itemsize, out_dt.itemsize
    # Native sublane packing: 8 rows for 32-bit, 16 for 16-bit, 32 for 8-bit.
    sub_mult = max(8, 32 // max(1, min(in_bytes, out_bytes)))

    vmem_cap = _vmem_capacity_bytes()
    if target_tile_bytes is None:
        # ~8 MiB blocks on 128 MiB-VMEM parts (v5e/v6e), ~4 MiB on v7x (64 MiB).
        target_tile_bytes = int(min(8 * _MIB, max(2 * _MIB, vmem_cap // 16)))
    # Double-buffered input + output blocks, plus compiler-scratch slack.
    footprint = 2 * target_tile_bytes * (1 + pl.cdiv(out_bytes, in_bytes)) + 8 * _MIB
    vmem_limit = int(min(max(32 * _MIB, footprint), (vmem_cap * 3) // 4))

    cols, pad = _choose_cols(total)
    x_flat = x.reshape(-1)
    if pad:
        # TODO(synk): mask the ragged tail in-kernel instead of paying
        # whole-array pad/slice copies; total % 128 == 0 for typical SNN
        # activation shapes, so this branch is normally never taken.
        x_flat = jnp.pad(x_flat, (0, pad))
    padded_total = total + pad
    rows = padded_total // cols

    tr = _choose_tile_rows(rows, cols, in_bytes, target_tile_bytes, sub_mult)
    grid = (pl.cdiv(rows, tr),)

    thr = jnp.asarray(threshold, jnp.float32).reshape(1)

    out2d = pl.pallas_call(
        _ts1_kernel,
        out_shape=jax.ShapeDtypeStruct((rows, cols), out_dt),
        grid_spec=pltpu.PrefetchScalarGridSpec(
            num_scalar_prefetch=1,
            grid=grid,
            in_specs=[pl.BlockSpec((tr, cols), lambda i, thr_ref: (i, 0))],
            out_specs=pl.BlockSpec((tr, cols), lambda i, thr_ref: (i, 0)),
        ),
        compiler_params=pltpu.CompilerParams(
            dimension_semantics=("parallel",),
            vmem_limit_bytes=vmem_limit,
        ),
        cost_estimate=pl.CostEstimate(
            flops=padded_total,
            transcendentals=0,
            bytes_accessed=padded_total * (in_bytes + out_bytes),
        ),
    )(thr, x_flat.reshape(rows, cols))

    out_flat = out2d.reshape(-1)
    if pad:
        out_flat = out_flat[:total]
    return out_flat.reshape(orig_shape)


if __name__ == "__main__":
    key = jax.random.PRNGKey(0)
    # NCHW input, as would feed a PyTorch conv-based SNN: batch=2, C=4, H=W=16
    x = jax.random.normal(key, (2, 4, 16, 16), dtype=jnp.float32) * 2.0

    threshold = 1.0
    out = jax.block_until_ready(ts1_node_forward(x, threshold=threshold))

    # Reference check (pure JAX): heaviside(x - threshold)
    ref = (x - threshold >= 0.0).astype(x.dtype)
    assert out.shape == x.shape
    assert out.dtype == x.dtype
    assert bool(jnp.all(out == ref))

    print("KERNEL_OK")
</pallas_src>

<mosaic_0001>
module attributes {stable_mosaic.version = 11 : i64} {
  func.func @_ts1_kernel(%arg0: i32, %arg1: memref<1xf32, #tpu.memory_space<smem>>, %arg2: memref<1x2048xf32, #tpu.memory_space<vmem>>, %arg3: memref<1x2048xf32, #tpu.memory_space<vmem>>) attributes {dimension_semantics = [#tpu.dimension_semantics<parallel>], iteration_bounds = array<i64: 1>, scalar_prefetch = 1 : i64, scratch_operands = 0 : i64, tpu.core_type = #tpu.core_type<tc>, window_params = [{transform_indices = @transform_0, window_bounds = array<i64: 1, 2048>}, {transform_indices = @transform_1, window_bounds = array<i64: 1, 2048>}]} {
    %c0 = arith.constant 0 : index
    %c0_0 = arith.constant 0 : index
    %0 = vector.load %arg2[%c0, %c0_0] : memref<1x2048xf32, #tpu.memory_space<vmem>>, vector<1x2048xf32>
    %c0_1 = arith.constant 0 : index
    %1 = memref.load %arg1[%c0_1] : memref<1xf32, #tpu.memory_space<smem>>
    %2 = vector.broadcast %1 : f32 to vector<1x2048xf32>
    %3 = arith.subf %0, %2 : vector<1x2048xf32>
    %cst = arith.constant 0.000000e+00 : f32
    %4 = vector.broadcast %cst : f32 to vector<1x2048xf32>
    %5 = arith.cmpf oge, %3, %4 : vector<1x2048xf32>
    %6 = arith.extui %5 : vector<1x2048xi1> to vector<1x2048xi32>
    %7 = arith.sitofp %6 : vector<1x2048xi32> to vector<1x2048xf32>
    %c0_2 = arith.constant 0 : index
    %c0_3 = arith.constant 0 : index
    %8 = vector.load %arg3[%c0_2, %c0_3] : memref<1x2048xf32, #tpu.memory_space<vmem>>, vector<1x2048xf32>
    tpu.vector_store %arg3[%c0_2, %c0_3], %7 {strides = array<i32>} : memref<1x2048xf32, #tpu.memory_space<vmem>>, vector<1x2048xf32>,
    return
  }
  func.func @transform_0(%arg0: i32, %arg1: memref<1xf32, #tpu.memory_space<smem>>) -> (i32, i32) {
    %c0_i32 = arith.constant 0 : i32
    %c0_i32_0 = arith.constant 0 : i32
    return %arg0, %c0_i32 : i32, i32
  }
  func.func @transform_1(%arg0: i32, %arg1: memref<1xf32, #tpu.memory_space<smem>>) -> (i32, i32) {
    %c0_i32 = arith.constant 0 : i32
    %c0_i32_0 = arith.constant 0 : i32
    return %arg0, %c0_i32 : i32, i32
  }
}

</mosaic_0001>

<llo_original>
// kernel: tpu_custom_call.1
$region0: #{tpu_custom_call.1}
  #allocation0 [shape = 'u32[]', space=smem, size = 0x4, offset = 0x4, fixed_abs, tag = 'smem constant byte address 0x4 - core index']
  #allocation1 [shape = 'u32[144,128]{1,0:T(1,128)}', space=vmem, size = 0x12000, scoped, tag = 'internal scratch']
  #allocation2 [shape = 's32[1]{0}', space=sflag, size = 0x4, scoped, tag = 'scoped memory for tpu_custom_call.1']
  #allocation3 [shape = 'f32[1]{0:T(128)S(6)}', space=smem, size = 0x200, scoped, tag = 'prefetched SMEM operand 0']
  %s0 = inlined_call_operand.<no memory space> [shape: f32[1], index: 0, kind: input, shape index: {}]
  %s1 = inlined_call_operand.hbm [shape: f32[1,2048], index: 1, kind: input, shape index: {}]
  %s2 = inlined_call_operand.hbm [shape: f32[1,2048], index: 2, kind: output, shape index: {}]
  %s3 = sld [smem:[#allocation0]]
  $region18: #{tpu_custom_call.1} parent=0
    _
  %s5 = ssub.s32 1, %s3
  %s6 = scalar_select 0, %s5, %s3
  %7 = sst [smem:[#allocation3]] %s0
  $region1: #{tpu_custom_call.1} parent=0
    #allocation4 [shape = 'u8[8192]{0}', space=vmem, size = 0x2000, scoped, tag = 'input window, operand 1, single buffered']
    #allocation5 [shape = 's32[1]{0}', space=sflag, size = 0x4, scoped, tag = 'scoped memory for tpu_custom_call.1']
    #allocation6 [shape = 's32[1]{0}', space=sflag, size = 0x4, scoped, tag = 'scoped memory for tpu_custom_call.1']
    #allocation7 [shape = 'u8[8192]{0}', space=vmem, size = 0x2000, scoped, tag = 'output window, operand 0, single buffered']
    %8 = vsyncpa [#allocation5], 0
    %9 = vsyncpa [#allocation6], 0
    // Predicated region
    $region2: #{tpu_custom_call.1} parent=1 // pred_check
      _
    $region3: #{tpu_custom_call.1} parent=1 // pred_check_branch
      %11 = sbr.rel (0) target = $region5
    $region4: #{tpu_custom_call.1} parent=1 // pred_region
      %s13 = ssub.s32 256, 256
      %14 = vsyncadd [#allocation5], %s13
      %s16 = sshll.u32 [#allocation4], 4
      %s17 = int_to_ptr.vmem [resolvable:$true] %s16
      %19 = dma.hbm_to_vmem [thread:$0]  %s1, 256, %s17, [#allocation5]
    $region5: #{tpu_custom_call.1} parent=1 // pred_fallthru
      _
    // Predicated region
    $region6: #{tpu_custom_call.1} parent=1 // pred_check
      _
    $region7: #{tpu_custom_call.1} parent=1 // pred_check_branch
      %21 = sbr.rel (0) target = $region9
    $region8: #{tpu_custom_call.1} parent=1 // pred_region
      %22 = dma.done [#allocation5], 256
    $region9: #{tpu_custom_call.1} parent=1 // pred_fallthru
      _
    %v23 = vld [vmem:[#allocation4] sm:$0xff]
    %v24 = vld [vmem:[#allocation4 + $0x8] sm:$0xff]
    %s25 = sld [smem:[#allocation3]]
    %v26 = vstv %s25
    %v27 = vsub.f32 %v23, %v26
    %v28 = vsub.f32 %v24, %v26
    %vm29 = vcmp.ge.f32.partialorder %v27, 0.0
    %vm30 = vcmp.ge.f32.partialorder %v28, 0.0
    %v31 = vsel %vm29, 1, 0
    %v32 = vsel %vm30, 1, 0
    %v33 = vcvt.s32.f32 %v31
    %v34 = vcvt.s32.f32 %v32
    %35 = vst [vmem:[#allocation7] sm:$0xff] %v33
    %36 = vst [vmem:[#allocation7 + $0x8] sm:$0xff] %v34
    // Predicated region
    $region10: #{tpu_custom_call.1} parent=1 // pred_check
      _
    $region11: #{tpu_custom_call.1} parent=1 // pred_check_branch
      %38 = sbr.rel (0) target = $region13
    $region12: #{tpu_custom_call.1} parent=1 // pred_region
      %s40 = ssub.s32 256, 256
      %41 = vsyncadd [#allocation6], %s40
      %s43 = sshll.u32 [#allocation7], 4
      %s44 = int_to_ptr.vmem [resolvable:$true] %s43
      %46 = dma.vmem_to_hbm [thread:$0]  %s44, 256, %s2, [#allocation6]
    $region13: #{tpu_custom_call.1} parent=1 // pred_fallthru
      _
    // Predicated region
    $region14: #{tpu_custom_call.1} parent=1 // pred_check
      _
    $region15: #{tpu_custom_call.1} parent=1 // pred_check_branch
      %48 = sbr.rel (0) target = $region17
    $region16: #{tpu_custom_call.1} parent=1 // pred_region
      %49 = dma.done [#allocation6], 256
    $region17: #{tpu_custom_call.1} parent=1 // pred_fallthru
      _
    %50 = vsyncpa [#allocation5], 1
    %51 = vsyncpa [#allocation6], 1

</llo_original>
